<compile_context>
chip_gen: v5e
topology: v5e:2x2
jax: 0.10.0
libtpu: 0.0.40
codegen_flags: <defaults>
</compile_context>

<pallas_src>
import functools

import jax
import jax.numpy as jnp
from jax.experimental import pallas as pl
from jax.experimental.pallas import tpu as pltpu

F_PAD = 128        # lane-dense padded width for node / hidden / output features
EDGE_HID = 64      # per-layer edge-MLP hidden width (2 layers fused -> 128 lanes)
DEG_LANE = F_PAD - 1  # spare lane used to carry the per-edge 1.0 for degree count


def _round_up(v, m):
  return (v + m - 1) // m * m


def _pad2(m, rows, cols):
  return jnp.zeros((rows, cols), jnp.float32).at[:m.shape[0], :m.shape[1]].set(m)


def _pad_edge_w2(w2, b2, in_dim, out_dim, row_offset):
  """Lay out the edge-MLP 2nd layer so we_flat[:, i*F_PAD + o] == We[:, i, o].

  Rows are zero-padded from 64 to 128 (row_offset selects which half of the
  fused edge-hidden activation feeds this layer); columns per input feature are
  zero-padded from out_dim to F_PAD so every message FMA is a full, unmasked
  128-lane group (and lane DEG_LANE stays exactly zero).
  """
  w = jnp.zeros((F_PAD, in_dim, F_PAD), jnp.float32)
  w = w.at[row_offset:row_offset + EDGE_HID, :, :out_dim].set(
      w2.reshape(EDGE_HID, in_dim, out_dim))
  b = jnp.zeros((1, in_dim, F_PAD), jnp.float32)
  b = b.at[:, :, :out_dim].set(b2.reshape(1, in_dim, out_dim))
  return w.reshape(F_PAD, in_dim * F_PAD), b.reshape(1, in_dim * F_PAD)


# --------------------- kernel 1: shared edge-MLP layer 1 -------------------- #

def _edge_hidden_kernel(ea_ref, w1_ref, b1_ref, eh_ref):
  # eh[:, :64]  = relu(edge_attr @ e1w1 + e1b1)   (conv1 half)
  # eh[:, 64:]  = relu(edge_attr @ e2w1 + e2b1)   (conv2 half)
  eh_ref[...] = jnp.maximum(
      jnp.dot(ea_ref[...], w1_ref[...], preferred_element_type=jnp.float32)
      + b1_ref[...], 0.0)


def _edge_hidden(edge_attr_pad, w1_cat, b1_cat, *, e_tile):
  e_pad, edge_in = edge_attr_pad.shape
  flops = 2 * e_pad * edge_in * F_PAD
  bytes_accessed = int(edge_attr_pad.size + w1_cat.size + b1_cat.size
                       + e_pad * F_PAD) * 4
  return pl.pallas_call(
      _edge_hidden_kernel,
      out_shape=jax.ShapeDtypeStruct((e_pad, F_PAD), jnp.float32),
      grid_spec=pltpu.PrefetchScalarGridSpec(
          num_scalar_prefetch=0,
          grid=(e_pad // e_tile,),
          in_specs=[pl.BlockSpec((e_tile, edge_in), lambda e: (e, 0)),
                    pl.BlockSpec(w1_cat.shape, lambda e: (0, 0)),
                    pl.BlockSpec(b1_cat.shape, lambda e: (0, 0))],
          out_specs=pl.BlockSpec((e_tile, F_PAD), lambda e: (e, 0))),
      compiler_params=pltpu.CompilerParams(dimension_semantics=("parallel",)),
      cost_estimate=pl.CostEstimate(flops=flops, transcendentals=0,
                                    bytes_accessed=bytes_accessed),
  )(edge_attr_pad, w1_cat, b1_cat)


# --------------------- kernel 2: per-edge messages -------------------------- #

def _messages_kernel(hfull_ref, eh_ref, src_ref, w2_ref, b2_ref, msg_ref, *,
                     in_dim):
  h_full = hfull_ref[...]           # [n_pad, F_PAD] node feature table (resident)
  eh = eh_ref[...]                  # [e_tile, 128] fused edge-MLP hidden tile
  src = src_ref[...]                # [e_tile, 1] int32 (-1 for padded edges)
  e_tile = eh.shape[0]
  n_pad = h_full.shape[0]

  # gather x[src] via one-hot matmul on the MXU (padded edges -> all-zero rows).
  # TODO(synk): switch to a scalar-prefetched DMA row gather for large n_pad.
  src_oh = (jax.lax.broadcasted_iota(jnp.int32, (e_tile, n_pad), 1)
            == src).astype(jnp.float32)
  x_src = jnp.dot(src_oh, h_full, preferred_element_type=jnp.float32)

  # edge-conditioned weights, lane-dense layout [e_tile, in_dim * F_PAD]
  we = jnp.dot(eh, w2_ref[...], preferred_element_type=jnp.float32) + b2_ref[...]

  # per-edge message; lane DEG_LANE carries a 1.0 so the downstream scatter
  # matmul produces node degrees for free.
  lane = jax.lax.broadcasted_iota(jnp.int32, (e_tile, F_PAD), 1)
  msgs = (lane == DEG_LANE).astype(jnp.float32)
  for i in range(in_dim):           # static unroll; in_dim is 4 / 16
    msgs = msgs + x_src[:, i:i + 1] * we[:, i * F_PAD:(i + 1) * F_PAD]
  msg_ref[...] = msgs               # 128-lane dense, unmasked store


def _messages(h_nodes, eh, src_col, w2p, b2p, *, in_dim, e_tile):
  n_pad = h_nodes.shape[0]
  e_pad = eh.shape[0]
  args = [h_nodes, eh, src_col, w2p, b2p]
  flops = int(2 * e_pad * n_pad * F_PAD                 # one-hot gather
              + 2 * e_pad * F_PAD * in_dim * F_PAD      # edge-MLP layer 2
              + 2 * e_pad * in_dim * F_PAD)             # message FMAs
  bytes_accessed = int(sum(int(a.size) * a.dtype.itemsize for a in args)
                       + e_pad * F_PAD * 4)
  return pl.pallas_call(
      functools.partial(_messages_kernel, in_dim=in_dim),
      out_shape=jax.ShapeDtypeStruct((e_pad, F_PAD), jnp.float32),
      grid_spec=pltpu.PrefetchScalarGridSpec(
          num_scalar_prefetch=0,
          grid=(e_pad // e_tile,),
          in_specs=[
              pl.BlockSpec((n_pad, F_PAD), lambda e: (0, 0)),    # grid-invariant
              pl.BlockSpec((e_tile, F_PAD), lambda e: (e, 0)),
              pl.BlockSpec((e_tile, 1), lambda e: (e, 0)),
              pl.BlockSpec(w2p.shape, lambda e: (0, 0)),
              pl.BlockSpec(b2p.shape, lambda e: (0, 0)),
          ],
          out_specs=pl.BlockSpec((e_tile, F_PAD), lambda e: (e, 0))),
      compiler_params=pltpu.CompilerParams(dimension_semantics=("parallel",)),
      cost_estimate=pl.CostEstimate(flops=flops, transcendentals=0,
                                    bytes_accessed=bytes_accessed),
  )(*args)


# --------------- kernel 3: scatter-mean + root/bias/ReLU (+fc) -------------- #

def _scatter_kernel(htile_ref, msg_ref, dst_ref, root_ref, bias_ref, *rest,
                    n_tile, apply_post):
  if apply_post:
    pw_ref, pb_ref, out_ref, acc_ref = rest
  else:
    out_ref, acc_ref = rest
    pw_ref = pb_ref = None

  n_i = pl.program_id(0)            # node-tile axis ("parallel")
  e_i = pl.program_id(1)            # edge-tile axis ("arbitrary", innermost)

  @pl.when(e_i == 0)
  def _init():
    acc_ref[...] = jnp.zeros_like(acc_ref)

  msgs = msg_ref[...]               # [e_tile, F_PAD]; lane DEG_LANE == 1.0
  dst = dst_ref[...]                # [1, e_tile] int32 (-1 for padded edges)
  e_tile = msgs.shape[0]

  node_base = n_i * n_tile
  dst_oh = (jax.lax.broadcasted_iota(jnp.int32, (n_tile, e_tile), 0) + node_base
            == dst).astype(jnp.float32)
  # single MXU dot accumulates both the message sum and (via DEG_LANE) degrees
  acc_ref[...] += jnp.dot(dst_oh, msgs, preferred_element_type=jnp.float32)

  # finalize: mean, root transform, bias, ReLU (+ optionally fused final fc)
  @pl.when(e_i == pl.num_programs(1) - 1)
  def _finalize():
    acc = acc_ref[...]
    deg = jnp.maximum(acc[:, DEG_LANE:DEG_LANE + 1], 1.0)
    # approx reciprocal on the EUP slot + one Newton step for f32-level accuracy
    r = pl.reciprocal(deg, approx=True)
    r = r * (2.0 - deg * r)
    out = (acc * r
           + jnp.dot(htile_ref[...], root_ref[...],
                     preferred_element_type=jnp.float32)
           + bias_ref[...])
    out = jnp.maximum(out, 0.0)       # both NNConv layers are followed by ReLU
    if apply_post:                    # fused final nn.Linear (conv2 only)
      out = (jnp.dot(out, pw_ref[...], preferred_element_type=jnp.float32)
             + pb_ref[...])
    out_ref[...] = out                # 128-lane dense, unmasked store


def _scatter_finalize(h_nodes, msgs, dst_row, rootp, biasp,
                      post_w=None, post_b=None, *, n_tile, e_tile):
  n_pad = h_nodes.shape[0]
  e_pad = msgs.shape[0]
  apply_post = post_w is not None

  in_specs = [
      pl.BlockSpec((n_tile, F_PAD), lambda n, e: (n, 0)),   # h for this node tile
      pl.BlockSpec((e_tile, F_PAD), lambda n, e: (e, 0)),   # message tile
      pl.BlockSpec((1, e_tile), lambda n, e: (0, e)),       # dst indices (lane-major)
      pl.BlockSpec(rootp.shape, lambda n, e: (0, 0)),
      pl.BlockSpec(biasp.shape, lambda n, e: (0, 0)),
  ]
  args = [h_nodes, msgs, dst_row, rootp, biasp]
  if apply_post:
    in_specs += [pl.BlockSpec(post_w.shape, lambda n, e: (0, 0)),
                 pl.BlockSpec(post_b.shape, lambda n, e: (0, 0))]
    args += [post_w, post_b]

  kernel = functools.partial(_scatter_kernel, n_tile=n_tile,
                             apply_post=apply_post)
  flops = int(2 * n_pad * e_pad * F_PAD                    # scatter matmul
              + 2 * n_pad * F_PAD * F_PAD * (2 if apply_post else 1))
  bytes_accessed = int(sum(int(a.size) * a.dtype.itemsize for a in args)
                       + n_pad * F_PAD * 4)

  return pl.pallas_call(
      kernel,
      out_shape=jax.ShapeDtypeStruct((n_pad, F_PAD), jnp.float32),
      grid_spec=pltpu.PrefetchScalarGridSpec(
          num_scalar_prefetch=0,
          grid=(n_pad // n_tile, e_pad // e_tile),
          in_specs=in_specs,
          out_specs=pl.BlockSpec((n_tile, F_PAD), lambda n, e: (n, 0)),
          scratch_shapes=[pltpu.VMEM((n_tile, F_PAD), jnp.float32)]),  # acc+deg
      compiler_params=pltpu.CompilerParams(
          dimension_semantics=("parallel", "arbitrary")),
      cost_estimate=pl.CostEstimate(flops=flops, transcendentals=0,
                                    bytes_accessed=bytes_accessed),
  )(*args)


# --------------------------------- wrapper ---------------------------------- #

def main_gnn_forward(x, edge_index, edge_attr, params, *,
                     node_in_dim, hidden_dim, output_dim,
                     n_tile=128, e_tile=256):
  """x: [N, node_in_dim] f32, edge_index: [2, E] int, edge_attr: [E, edge_in] f32."""
  assert hidden_dim < F_PAD and output_dim < F_PAD  # DEG_LANE must stay free
  n_nodes = x.shape[0]
  n_edges = edge_attr.shape[0]

  n_pad = _round_up(max(n_nodes, n_tile), n_tile)
  e_pad = _round_up(max(n_edges, e_tile), e_tile)

  # the edge-hidden kernel is pure step-overhead at K=edge_in, so use the
  # largest tile that divides e_pad (up to 4096)
  eh_tile = e_tile
  for cand in (4096, 2048, 1024, 512):
    if e_pad % cand == 0:
      eh_tile = max(eh_tile, cand)
      break

  # lane/sublane-friendly padding (padded edges carry src=dst=-1 -> no-ops)
  x_pad = jnp.zeros((n_pad, F_PAD), jnp.float32).at[:n_nodes, :node_in_dim].set(x)
  ea_pad = jnp.zeros((e_pad, edge_attr.shape[1]), jnp.float32).at[:n_edges].set(edge_attr)
  src = jnp.full((e_pad, 1), -1, jnp.int32).at[:n_edges, 0].set(
      edge_index[0].astype(jnp.int32))
  dst = jnp.full((1, e_pad), -1, jnp.int32).at[0, :n_edges].set(
      edge_index[1].astype(jnp.int32))

  # fuse the two 64-wide edge-MLP first layers into one 128-lane matmul
  w1_cat = jnp.concatenate([params["e1w1"], params["e2w1"]], axis=1)
  b1_cat = jnp.concatenate([params["e1b1"], params["e2b1"]], axis=1)

  w2p_1, b2p_1 = _pad_edge_w2(params["e1w2"], params["e1b2"],
                              node_in_dim, hidden_dim, row_offset=0)
  w2p_2, b2p_2 = _pad_edge_w2(params["e2w2"], params["e2b2"],
                              hidden_dim, hidden_dim, row_offset=EDGE_HID)

  root1p = _pad2(params["root1"], F_PAD, F_PAD)
  bias1p = _pad2(params["bias1"], 1, F_PAD)
  root2p = _pad2(params["root2"], F_PAD, F_PAD)
  bias2p = _pad2(params["bias2"], 1, F_PAD)
  fcwp = _pad2(params["fcw"], F_PAD, F_PAD)
  fcbp = _pad2(params["fcb"], 1, F_PAD)

  # shared edge-MLP layer-1 activations, computed once and reused by both convs
  eh = _edge_hidden(ea_pad, w1_cat, b1_cat, e_tile=eh_tile)

  # conv1: per-edge messages, then scatter-mean + root/bias/ReLU
  msgs1 = _messages(x_pad, eh, src, w2p_1, b2p_1,
                    in_dim=node_in_dim, e_tile=e_tile)
  h1 = _scatter_finalize(x_pad, msgs1, dst, root1p, bias1p,
                         n_tile=n_tile, e_tile=e_tile)

  # conv2 (+ fused final fc Linear in its finalize step)
  msgs2 = _messages(h1, eh, src, w2p_2, b2p_2,
                    in_dim=hidden_dim, e_tile=e_tile)
  out = _scatter_finalize(h1, msgs2, dst, root2p, bias2p, fcwp, fcbp,
                          n_tile=n_tile, e_tile=e_tile)
  return out[:n_nodes, :output_dim]


# Pure-JAX reference (same semantics) for a sanity check.
def _reference(x, edge_index, edge_attr, params, *, node_in_dim, hidden_dim):
  src, dst = edge_index[0], edge_index[1]
  n_nodes = x.shape[0]

  def nnconv(h, w1, b1, w2, b2, root, bias, in_dim, out_dim):
    e_h = jnp.maximum(edge_attr @ w1 + b1, 0.0)
    we = (e_h @ w2 + b2).reshape(-1, in_dim, out_dim)
    msgs = jnp.einsum("ei,eio->eo", h[src], we)
    agg = jnp.zeros((n_nodes, out_dim), jnp.float32).at[dst].add(msgs)
    cnt = jnp.zeros((n_nodes, 1), jnp.float32).at[dst].add(1.0)
    agg = agg / jnp.maximum(cnt, 1.0)
    return agg + h @ root + bias

  h1 = jnp.maximum(nnconv(x, params["e1w1"], params["e1b1"], params["e1w2"],
                          params["e1b2"], params["root1"], params["bias1"],
                          node_in_dim, hidden_dim), 0.0)
  h2 = jnp.maximum(nnconv(h1, params["e2w1"], params["e2b1"], params["e2w2"],
                          params["e2b2"], params["root2"], params["bias2"],
                          hidden_dim, hidden_dim), 0.0)
  return h2 @ params["fcw"] + params["fcb"]


# ----------------------------------- main ----------------------------------- #

if __name__ == "__main__":
  # small synthetic problem that still exercises multiple node and edge tiles
  N, E = 200, 700
  NODE_IN, EDGE_IN, HIDDEN, OUT = 4, 6, 16, 3

  key = jax.random.PRNGKey(0)
  ks = jax.random.split(key, 20)

  def init(k, shape, scale=0.1):
    return (scale * jax.random.normal(k, shape)).astype(jnp.float32)

  params = {
      # edge_nn1: Linear(EDGE_IN, 64) -> ReLU -> Linear(64, NODE_IN*HIDDEN)
      "e1w1": init(ks[0], (EDGE_IN, 64)),
      "e1b1": init(ks[1], (1, 64)),
      "e1w2": init(ks[2], (64, NODE_IN * HIDDEN)),
      "e1b2": init(ks[3], (1, NODE_IN * HIDDEN)),
      "root1": init(ks[4], (NODE_IN, HIDDEN)),
      "bias1": init(ks[5], (1, HIDDEN)),
      # edge_nn2: Linear(EDGE_IN, 64) -> ReLU -> Linear(64, HIDDEN*HIDDEN)
      "e2w1": init(ks[6], (EDGE_IN, 64)),
      "e2b1": init(ks[7], (1, 64)),
      "e2w2": init(ks[8], (64, HIDDEN * HIDDEN)),
      "e2b2": init(ks[9], (1, HIDDEN * HIDDEN)),
      "root2": init(ks[10], (HIDDEN, HIDDEN)),
      "bias2": init(ks[11], (1, HIDDEN)),
      # fc: Linear(HIDDEN, OUT)
      "fcw": init(ks[12], (HIDDEN, OUT)),
      "fcb": init(ks[13], (1, OUT)),
  }

  x = jax.random.normal(ks[14], (N, NODE_IN), dtype=jnp.float32)
  edge_attr = jax.random.normal(ks[15], (E, EDGE_IN), dtype=jnp.float32)
  edge_index = jax.random.randint(ks[16], (2, E), 0, N, dtype=jnp.int32)

  out = main_gnn_forward(x, edge_index, edge_attr, params,
                         node_in_dim=NODE_IN, hidden_dim=HIDDEN, output_dim=OUT)
  out = jax.block_until_ready(out)

  ref = _reference(x, edge_index, edge_attr, params,
                   node_in_dim=NODE_IN, hidden_dim=HIDDEN)
  assert out.shape == (N, OUT)
  assert jnp.allclose(out, ref, atol=1e-4, rtol=1e-4), float(
      jnp.max(jnp.abs(out - ref)))

  print("KERNEL_OK")
</pallas_src>

<mosaic_0001>
module attributes {stable_mosaic.version = 11 : i64} {
  func.func @_edge_hidden_kernel(%arg0: i32, %arg1: memref<256x6xf32, #tpu.memory_space<vmem>>, %arg2: memref<6x128xf32, #tpu.memory_space<vmem>>, %arg3: memref<1x128xf32, #tpu.memory_space<vmem>>, %arg4: memref<256x128xf32, #tpu.memory_space<vmem>>) attributes {dimension_semantics = [#tpu.dimension_semantics<parallel>], iteration_bounds = array<i64: 3>, scalar_prefetch = 0 : i64, scratch_operands = 0 : i64, tpu.core_type = #tpu.core_type<tc>, window_params = [{transform_indices = @transform_0, window_bounds = array<i64: 256, 6>}, {pipeline_mode = #tpu.pipeline_mode<synchronous>, transform_indices = @transform_1, window_bounds = array<i64: 6, 128>}, {pipeline_mode = #tpu.pipeline_mode<synchronous>, transform_indices = @transform_2, window_bounds = array<i64: 1, 128>}, {transform_indices = @transform_3, window_bounds = array<i64: 256, 128>}]} {
    %c0 = arith.constant 0 : index
    %c0_0 = arith.constant 0 : index
    %0 = vector.load %arg1[%c0, %c0_0] : memref<256x6xf32, #tpu.memory_space<vmem>>, vector<256x6xf32>
    %c0_1 = arith.constant 0 : index
    %c0_2 = arith.constant 0 : index
    %1 = vector.load %arg2[%c0_1, %c0_2] : memref<6x128xf32, #tpu.memory_space<vmem>>, vector<6x128xf32>
    %cst = arith.constant dense<0.000000e+00> : vector<256x128xf32>
    %2 = tpu.matmul %0, %1, %cst {dimension_numbers = #tpu.dot_dimension_numbers<[1], [0], [0], [1], [0, 0, 1, 1], [], []>} : vector<256x6xf32>, vector<6x128xf32>, vector<256x128xf32> -> vector<256x128xf32>
    %c0_3 = arith.constant 0 : index
    %c0_4 = arith.constant 0 : index
    %3 = vector.load %arg3[%c0_3, %c0_4] : memref<1x128xf32, #tpu.memory_space<vmem>>, vector<1x128xf32>
    %4 = vector.broadcast %3 : vector<1x128xf32> to vector<256x128xf32>
    %5 = arith.addf %2, %4 : vector<256x128xf32>
    %cst_5 = arith.constant 0.000000e+00 : f32
    %6 = vector.broadcast %cst_5 : f32 to vector<256x128xf32>
    %7 = arith.maximumf %5, %6 : vector<256x128xf32>
    %c0_6 = arith.constant 0 : index
    %c0_7 = arith.constant 0 : index
    %8 = vector.load %arg4[%c0_6, %c0_7] : memref<256x128xf32, #tpu.memory_space<vmem>>, vector<256x128xf32>
    tpu.vector_store %arg4[%c0_6, %c0_7], %7 {strides = array<i32>} : memref<256x128xf32, #tpu.memory_space<vmem>>, vector<256x128xf32>,
    return
  }
  func.func @transform_0(%arg0: i32) -> (i32, i32) {
    %c0_i32 = arith.constant 0 : i32
    %c0_i32_0 = arith.constant 0 : i32
    return %arg0, %c0_i32 : i32, i32
  }
  func.func @transform_1(%arg0: i32) -> (i32, i32) {
    %c0_i32 = arith.constant 0 : i32
    %c0_i32_0 = arith.constant 0 : i32
    %c0_i32_1 = arith.constant 0 : i32
    return %c0_i32, %c0_i32_0 : i32, i32
  }
  func.func @transform_2(%arg0: i32) -> (i32, i32) {
    %c0_i32 = arith.constant 0 : i32
    %c0_i32_0 = arith.constant 0 : i32
    %c0_i32_1 = arith.constant 0 : i32
    return %c0_i32, %c0_i32_0 : i32, i32
  }
  func.func @transform_3(%arg0: i32) -> (i32, i32) {
    %c0_i32 = arith.constant 0 : i32
    %c0_i32_0 = arith.constant 0 : i32
    return %arg0, %c0_i32 : i32, i32
  }
}

</mosaic_0001>

<llo_original>
// kernel: tpu_custom_call.1
$region0: #{tpu_custom_call.1}
  #allocation0 [shape = 'u32[]', space=smem, size = 0x4, offset = 0x4, fixed_abs, tag = 'smem constant byte address 0x4 - core index']
  #allocation1 [shape = 'u32[72,128]{1,0:T(1,128)}', space=vmem, size = 0x9000, scoped, tag = 'internal scratch']
  %s0 = inlined_call_operand.vmem [shape: f32[768,6], index: 0, kind: input, shape index: {}]
  %s1 = inlined_call_operand.vmem [shape: f32[6,128], index: 1, kind: input, shape index: {}]
  %s2 = inlined_call_operand.vmem [shape: f32[1,128], index: 2, kind: input, shape index: {}]
  %s3 = inlined_call_operand.hbm [shape: f32[768,128], index: 3, kind: output, shape index: {}]
  %s4 = sld [smem:[#allocation0]]
  $region45: #{tpu_custom_call.1} parent=0
    _
  %s6 = ssub.s32 1, %s4
  %s7 = scalar_select 0, %s6, %s4
  $region1: #{tpu_custom_call.1} parent=0
    #allocation2 [shape = 'u8[262144]{0}', space=vmem, size = 0x40000, scoped, tag = 'output window, operand 0']
    #allocation3 [shape = 's32[2]{0}', space=sflag, size = 0x8, scoped, tag = 'scoped memory for tpu_custom_call.1']
    %8 = vsyncpa [#allocation3], 0
    %s9 = scalar_lea.sflag [#allocation3], 1
    %10 = vsyncpa %s9, 0
    loop: start=0, step=1, limit=5
    $region2: #{tpu_custom_call.1} parent=1 // loop_pre_header
      _
    $region3: #{tpu_custom_call.1} parent=1 // loop_header
      %s12 = sphi 0, %s16
      %p13 = scmp.ge.s32.totalorder %s12, 5
      %s22 = sphi 0, %s24
      %s25 = sphi 0, %s22
      %s26 = sphi 0, %s25
      %s42 = sphi 0, %s26
      %s46 = sphi 0, %s46
      %s48 = sphi 0, %s46
      %s49 = sphi 0, %s48
      %s63 = sphi 0, %s49
      %s67 = sphi 0, %s67
      %s69 = sphi 0, %s67
      %s70 = sphi 0, %s69
      %s84 = sphi 0, %s70
      %s90 = sphi 0, %s92
      %s93 = sphi 0, %s90
      %s94 = sphi 0, %s93
      %s110 = sphi 0, %s94
    $region4: #{tpu_custom_call.1} parent=1 // loop_header_branch
      %15 = sbr.rel (%p13) target = $region8
    $region5: #{tpu_custom_call.1} parent=1 // loop_body
      %s17 = ssub.s32 %s12, 1
      %s18 = ssub.s32 %s12, 2
      %s19 = sadd.s32 %s12, 1
      %s20 = ssub.s32 %s12, %s19
      %p21 = scmp.eq.s32.totalorder %s20, 0
      %s23 = sadd.s32 %s22, 1
      %s24 = scalar_select %p21, %s22, %s23
      %p27 = pneg %p21
      %p28 = scmp.eq.s32.totalorder %s12, 2
      %p29 = por %p27, %p28
      %p30 = scmp.ne.s32.totalorder %s22, %s25
      %p31 = scmp.eq.s32.totalorder %s12, 0
      %p32 = por %p30, %p31
      %p33 = scmp.ne.s32.totalorder %s22, %s25
      %p34 = scmp.eq.s32.totalorder %s17, 2
      %p35 = por %p33, %p34
      %p36 = scmp.ne.s32.totalorder %s25, %s26
      %p37 = scmp.eq.s32.totalorder %s17, 0
      %p38 = por %p36, %p37
      %p39 = scmp.ne.s32.totalorder %s25, %s26
      %p40 = scmp.eq.s32.totalorder %s18, 2
      %p41 = por %p39, %p40
      %p43 = scmp.ne.s32.totalorder %s26, %s42
      %p44 = scmp.eq.s32.totalorder %s18, 0
      %p45 = por %p43, %p44
      %s47 = sadd.s32 %s46, 1
      %p50 = scmp.eq.s32.totalorder %s12, 2
      %p51 = scmp.ne.s32.totalorder %s46, %s48
      %p52 = scmp.eq.s32.totalorder %s12, 0
      %p53 = por %p51, %p52
      %p54 = scmp.ne.s32.totalorder %s46, %s48
      %p55 = scmp.eq.s32.totalorder %s17, 2
      %p56 = por %p54, %p55
      %p57 = scmp.ne.s32.totalorder %s48, %s49
      %p58 = scmp.eq.s32.totalorder %s17, 0
      %p59 = por %p57, %p58
      %p60 = scmp.ne.s32.totalorder %s48, %s49
      %p61 = scmp.eq.s32.totalorder %s18, 2
      %p62 = por %p60, %p61
      %p64 = scmp.ne.s32.totalorder %s49, %s63
      %p65 = scmp.eq.s32.totalorder %s18, 0
      %p66 = por %p64, %p65
      %s68 = sadd.s32 %s67, 1
      %p71 = scmp.eq.s32.totalorder %s12, 2
      %p72 = scmp.ne.s32.totalorder %s67, %s69
      %p73 = scmp.eq.s32.totalorder %s12, 0
      %p74 = por %p72, %p73
      %p75 = scmp.ne.s32.totalorder %s67, %s69
      %p76 = scmp.eq.s32.totalorder %s17, 2
      %p77 = por %p75, %p76
      %p78 = scmp.ne.s32.totalorder %s69, %s70
      %p79 = scmp.eq.s32.totalorder %s17, 0
      %p80 = por %p78, %p79
      %p81 = scmp.ne.s32.totalorder %s69, %s70
      %p82 = scmp.eq.s32.totalorder %s18, 2
      %p83 = por %p81, %p82
      %p85 = scmp.ne.s32.totalorder %s70, %s84
      %p86 = scmp.eq.s32.totalorder %s18, 0
      %p87 = por %p85, %p86
      %s88 = ssub.s32 %s12, %s19
      %p89 = scmp.eq.s32.totalorder %s88, 0
      %s91 = sadd.s32 %s90, 1
      %s92 = scalar_select %p89, %s90, %s91
      %p95 = pneg %p89
      %p96 = scmp.eq.s32.totalorder %s12, 2
      %p97 = por %p95, %p96
      %p98 = scmp.ne.s32.totalorder %s90, %s93
      %p99 = scmp.eq.s32.totalorder %s12, 0
      %p100 = por %p98, %p99
      %p101 = scmp.ne.s32.totalorder %s90, %s93
      %p102 = scmp.eq.s32.totalorder %s17, 2
      %p103 = por %p101, %p102
      %p104 = scmp.ne.s32.totalorder %s93, %s94
      %p105 = scmp.eq.s32.totalorder %s17, 0
      %p106 = por %p104, %p105
      %p107 = scmp.ne.s32.totalorder %s93, %s94
      %p108 = scmp.eq.s32.totalorder %s18, 2
      %p109 = por %p107, %p108
      %p111 = scmp.ne.s32.totalorder %s94, %s110
      %p112 = scmp.eq.s32.totalorder %s18, 0
      %p113 = por %p111, %p112
      %p114 = scmp.le.s32.totalorder 1, %s12
      %p115 = scmp.lt.s32.totalorder %s12, 4
      %p116 = pnand %p114, %p115
      %p117 = pneg %p116
      // Predicated region
      $region9: #{tpu_custom_call.1} parent=5 // pred_check
        _
      $region10: #{tpu_custom_call.1} parent=5 // pred_check_branch
        %119 = sbr.rel (%p116) target = $region12
      $region11: #{tpu_custom_call.1} parent=5 // pred_region
        %s120 = ssub.s32 %s12, 1
        // Predicated region
        $region13: #{tpu_custom_call.1} parent=11 // pred_check
          %p121 = pneg %p59
        $region14: #{tpu_custom_call.1} parent=11 // pred_check_branch
          %123 = sbr.rel (%p121) target = $region16
        $region15: #{tpu_custom_call.1} parent=11 // pred_region
          _
        $region16: #{tpu_custom_call.1} parent=11 // pred_fallthru
          _
        // Predicated region
        $region17: #{tpu_custom_call.1} parent=11 // pred_check
          %p124 = pneg %p80
        $region18: #{tpu_custom_call.1} parent=11 // pred_check_branch
          %126 = sbr.rel (%p124) target = $region20
        $region19: #{tpu_custom_call.1} parent=11 // pred_region
          _
        $region20: #{tpu_custom_call.1} parent=11 // pred_fallthru
          _
      $region12: #{tpu_custom_call.1} parent=5 // pred_fallthru
        _
      %p127 = scmp.lt.s32.totalorder %s12, 3
      // Predicated region
      $region21: #{tpu_custom_call.1} parent=5 // pred_check
        %p128 = pneg %p127
      $region22: #{tpu_custom_call.1} parent=5 // pred_check_branch
        %130 = sbr.rel (%p128) target = $region24
      $region23: #{tpu_custom_call.1} parent=5 // pred_region
        // Predicated region
        $region25: #{tpu_custom_call.1} parent=23 // pred_check
          %p131 = pneg %p32
        $region26: #{tpu_custom_call.1} parent=23 // pred_check_branch
          %133 = sbr.rel (%p131) target = $region28
        $region27: #{tpu_custom_call.1} parent=23 // pred_region
          %s134 = smul.u32 32, %s12
          %p135 = scmp.lt.s32.totalorder %s134, 95
          %s136 = scalar_select %p135, %s134, 95
          %s137 = smul.addr %s136, 8
          %s138 = scalar_lea.vmem %s0, %s137
          %s139 = smul.u32 32, %s12
        $region28: #{tpu_custom_call.1} parent=23 // pred_fallthru
          _
      $region24: #{tpu_custom_call.1} parent=5 // pred_fallthru
        _
      %p140 = scmp.le.s32.totalorder 1, %s12
      %p141 = scmp.lt.s32.totalorder %s12, 4
      %p142 = pnand %p140, %p141
      %p143 = pneg %p142
      // Predicated region
      $region29: #{tpu_custom_call.1} parent=5 // pred_check
        _
      $region30: #{tpu_custom_call.1} parent=5 // pred_check_branch
        %145 = sbr.rel (%p142) target = $region32
      $region31: #{tpu_custom_call.1} parent=5 // pred_region
        %s146 = ssub.s32 %s12, 1
        %s147 = smul.u32 32, %s17
        %p148 = scmp.lt.s32.totalorder %s147, 95
        %s149 = scalar_select %p148, %s147, 95
        %s150 = smul.addr %s149, 8
        %s151 = scalar_lea.vmem %s0, %s150
        %p152 = pneg %p38
        %p153 = pneg %p35
        %p154 = pneg %p59
        %p155 = pneg %p56
        %p156 = pneg %p80
        %p157 = pneg %p77
        %p158 = pneg %p106
        %p159 = pneg %p103
        %s160 = sand.u32 %s93, 1
        %s161 = scalar_lea.sflag [#allocation3], %s160
        %s162 = sand.u32 %s93, 1
        %s163 = smul.addr %s162, 256
        %s164 = scalar_lea.vmem [#allocation2], %s163
        %s165 = smul.u32 32, %s17
        %p166 = scmp.lt.s32.totalorder %s165, 95
        %s167 = scalar_select %p166, %s165, 95
        %s168 = smul.addr %s167, 8
        %s169 = scalar_lea.vmem %s0, %s168
        %s170 = smul.u32 32, %s17
        %s171 = smul.u32 32, %s17
        %v172 = vld [vmem:[%s169] sm:$0xff]
        %v173 = vld [vmem:[%s169 + $0x8] sm:$0xff]
        %v174 = vld [vmem:[%s169 + $0x10] sm:$0xff]
        %v175 = vld [vmem:[%s169 + $0x18] sm:$0xff]
        %v176 = vld [vmem:[%s169 + $0x20] sm:$0xff]
        %v177 = vld [vmem:[%s169 + $0x28] sm:$0xff]
        %v178 = vld [vmem:[%s169 + $0x30] sm:$0xff]
        %v179 = vld [vmem:[%s169 + $0x38] sm:$0xff]
        %v180 = vld [vmem:[%s169 + $0x40] sm:$0xff]
        %v181 = vld [vmem:[%s169 + $0x48] sm:$0xff]
        %v182 = vld [vmem:[%s169 + $0x50] sm:$0xff]
        %v183 = vld [vmem:[%s169 + $0x58] sm:$0xff]
        %v184 = vld [vmem:[%s169 + $0x60] sm:$0xff]
        %v185 = vld [vmem:[%s169 + $0x68] sm:$0xff]
        %v186 = vld [vmem:[%s169 + $0x70] sm:$0xff]
        %v187 = vld [vmem:[%s169 + $0x78] sm:$0xff]
        %v188 = vld [vmem:[%s169 + $0x80] sm:$0xff]
        %v189 = vld [vmem:[%s169 + $0x88] sm:$0xff]
        %v190 = vld [vmem:[%s169 + $0x90] sm:$0xff]
        %v191 = vld [vmem:[%s169 + $0x98] sm:$0xff]
        %v192 = vld [vmem:[%s169 + $0xa0] sm:$0xff]
        %v193 = vld [vmem:[%s169 + $0xa8] sm:$0xff]
        %v194 = vld [vmem:[%s169 + $0xb0] sm:$0xff]
        %v195 = vld [vmem:[%s169 + $0xb8] sm:$0xff]
        %v196 = vld [vmem:[%s169 + $0xc0] sm:$0xff]
        %v197 = vld [vmem:[%s169 + $0xc8] sm:$0xff]
        %v198 = vld [vmem:[%s169 + $0xd0] sm:$0xff]
        %v199 = vld [vmem:[%s169 + $0xd8] sm:$0xff]
        %v200 = vld [vmem:[%s169 + $0xe0] sm:$0xff]
        %v201 = vld [vmem:[%s169 + $0xe8] sm:$0xff]
        %v202 = vld [vmem:[%s169 + $0xf0] sm:$0xff]
        %v203 = vld [vmem:[%s169 + $0xf8] sm:$0xff]
        %v204 = vld [vmem:[%s1] sm:$0x3f]
        %v205 = vld [vmem:[%s2] sm:$0x1]
        %v207 = vperm.slane %v205, 0
        %vm209 = vcmask 48128
        %v211 = vsel %vm209, %v172, 0
        %v214 = vsel %vm209, %v173, 0
        %v217 = vsel %vm209, %v174, 0
        %v220 = vsel %vm209, %v175, 0
        %v223 = vsel %vm209, %v176, 0
        %v226 = vsel %vm209, %v177, 0
        %v229 = vsel %vm209, %v178, 0
        %v232 = vsel %vm209, %v179, 0
        %v235 = vsel %vm209, %v180, 0
        %v238 = vsel %vm209, %v181, 0
        %v241 = vsel %vm209, %v182, 0
        %v244 = vsel %vm209, %v183, 0
        %v247 = vsel %vm209, %v184, 0
        %v250 = vsel %vm209, %v185, 0
        %v253 = vsel %vm209, %v186, 0
        %v256 = vsel %vm209, %v187, 0
        %v259 = vsel %vm209, %v188, 0
        %v262 = vsel %vm209, %v189, 0
        %v265 = vsel %vm209, %v190, 0
        %v268 = vsel %vm209, %v191, 0
        %v271 = vsel %vm209, %v192, 0
        %v274 = vsel %vm209, %v193, 0
        %v277 = vsel %vm209, %v194, 0
        %v280 = vsel %vm209, %v195, 0
        %v283 = vsel %vm209, %v196, 0
        %v286 = vsel %vm209, %v197, 0
        %v289 = vsel %vm209, %v198, 0
        %v292 = vsel %vm209, %v199, 0
        %v295 = vsel %vm209, %v200, 0
        %v298 = vsel %vm209, %v201, 0
        %v301 = vsel %vm209, %v202, 0
        %v304 = vsel %vm209, %v203, 0
        %vm306 = vcmask 1045504
        %v308 = vsel %vm306, %v204, 0
        %310 = vmatpush.msra.mxu0 0.0
        %311 = vmatpush.msra.mxu0 0.0
        %312 = vmatpush.msra.mxu0 0.0
        %313 = vmatpush.msra.mxu0 0.0
        %314 = vmatpush.msra.mxu0 0.0
        %315 = vmatpush.msra.mxu0 0.0
        %316 = vmatpush.msra.mxu0 0.0
        %317 = vmatpush.msra.mxu0 0.0
        %318 = vmatpush.msra.mxu0 0.0
        %319 = vmatpush.msra.mxu0 0.0
        %320 = vmatpush.msra.mxu0 0.0
        %321 = vmatpush.msra.mxu0 0.0
        %322 = vmatpush.msra.mxu0 0.0
        %323 = vmatpush.msra.mxu0 0.0
        %324 = vmatpush.msra.mxu0 0.0
        %325 = vmatpush.msra.mxu0 %v308
        %326 = vmatmul.f32.gmra.mxu0 %v211
        %v327 = vpop.f32.mrf.mxu0
        %v328 = vadd.f32 %v207, %v327
        %329 = vmatmul.f32.gmra.mxu0 %v214
        %v330 = vpop.f32.mrf.mxu0
        %v331 = vadd.f32 %v207, %v330
        %332 = vmatmul.f32.gmra.mxu0 %v217
        %v333 = vpop.f32.mrf.mxu0
        %v334 = vadd.f32 %v207, %v333
        %335 = vmatmul.f32.gmra.mxu0 %v220
        %v336 = vpop.f32.mrf.mxu0
        %v337 = vadd.f32 %v207, %v336
        %338 = vmatmul.f32.gmra.mxu0 %v223
        %v339 = vpop.f32.mrf.mxu0
        %v340 = vadd.f32 %v207, %v339
        %341 = vmatmul.f32.gmra.mxu0 %v226
        %v342 = vpop.f32.mrf.mxu0
        %v343 = vadd.f32 %v207, %v342
        %344 = vmatmul.f32.gmra.mxu0 %v229
        %v345 = vpop.f32.mrf.mxu0
        %v346 = vadd.f32 %v207, %v345
        %347 = vmatmul.f32.gmra.mxu0 %v232
        %v348 = vpop.f32.mrf.mxu0
        %v349 = vadd.f32 %v207, %v348
        %350 = vmatmul.f32.gmra.mxu0 %v235
        %v351 = vpop.f32.mrf.mxu0
        %v352 = vadd.f32 %v207, %v351
        %353 = vmatmul.f32.gmra.mxu0 %v238
        %v354 = vpop.f32.mrf.mxu0
        %v355 = vadd.f32 %v207, %v354
        %356 = vmatmul.f32.gmra.mxu0 %v241
        %v357 = vpop.f32.mrf.mxu0
        %v358 = vadd.f32 %v207, %v357
        %359 = vmatmul.f32.gmra.mxu0 %v244
        %v360 = vpop.f32.mrf.mxu0
        %v361 = vadd.f32 %v207, %v360
        %362 = vmatmul.f32.gmra.mxu0 %v247
        %v363 = vpop.f32.mrf.mxu0
        %v364 = vadd.f32 %v207, %v363
        %365 = vmatmul.f32.gmra.mxu0 %v250
        %v366 = vpop.f32.mrf.mxu0
        %v367 = vadd.f32 %v207, %v366
        %368 = vmatmul.f32.gmra.mxu0 %v253
        %v369 = vpop.f32.mrf.mxu0
        %v370 = vadd.f32 %v207, %v369
        %371 = vmatmul.f32.gmra.mxu0 %v256
        %v372 = vpop.f32.mrf.mxu0
        %v373 = vadd.f32 %v207, %v372
        %374 = vmatmul.f32.gmra.mxu0 %v259
        %v375 = vpop.f32.mrf.mxu0
        %v376 = vadd.f32 %v207, %v375
        %377 = vmatmul.f32.gmra.mxu0 %v262
        %v378 = vpop.f32.mrf.mxu0
        %v379 = vadd.f32 %v207, %v378
        %380 = vmatmul.f32.gmra.mxu0 %v265
        %v381 = vpop.f32.mrf.mxu0
        %v382 = vadd.f32 %v207, %v381
        %383 = vmatmul.f32.gmra.mxu0 %v268
        %v384 = vpop.f32.mrf.mxu0
        %v385 = vadd.f32 %v207, %v384
        %386 = vmatmul.f32.gmra.mxu0 %v271
        %v387 = vpop.f32.mrf.mxu0
        %v388 = vadd.f32 %v207, %v387
        %389 = vmatmul.f32.gmra.mxu0 %v274
        %v390 = vpop.f32.mrf.mxu0
        %v391 = vadd.f32 %v207, %v390
        %392 = vmatmul.f32.gmra.mxu0 %v277
        %v393 = vpop.f32.mrf.mxu0
        %v394 = vadd.f32 %v207, %v393
        %395 = vmatmul.f32.gmra.mxu0 %v280
        %v396 = vpop.f32.mrf.mxu0
        %v397 = vadd.f32 %v207, %v396
        %398 = vmatmul.f32.gmra.mxu0 %v283
        %v399 = vpop.f32.mrf.mxu0
        %v400 = vadd.f32 %v207, %v399
        %401 = vmatmul.f32.gmra.mxu0 %v286
        %v402 = vpop.f32.mrf.mxu0
        %v403 = vadd.f32 %v207, %v402
        %404 = vmatmul.f32.gmra.mxu0 %v289
        %v405 = vpop.f32.mrf.mxu0
        %v406 = vadd.f32 %v207, %v405
        %407 = vmatmul.f32.gmra.mxu0 %v292
        %v408 = vpop.f32.mrf.mxu0
        %v409 = vadd.f32 %v207, %v408
        %410 = vmatmul.f32.gmra.mxu0 %v295
        %v411 = vpop.f32.mrf.mxu0
        %v412 = vadd.f32 %v207, %v411
        %413 = vmatmul.f32.gmra.mxu0 %v298
        %v414 = vpop.f32.mrf.mxu0
        %v415 = vadd.f32 %v207, %v414
        %416 = vmatmul.f32.gmra.mxu0 %v301
        %v417 = vpop.f32.mrf.mxu0
        %v418 = vadd.f32 %v207, %v417
        %419 = vmatmul.f32.gmra.mxu0 %v304
        %v420 = vpop.f32.mrf.mxu0
        %v421 = vadd.f32 %v207, %v420
        %422 = vdwg.mxu0
        %v423 = vmax.f32 %v328, 0.0
        %v424 = vmax.f32 %v331, 0.0
        %v425 = vmax.f32 %v334, 0.0
        %v426 = vmax.f32 %v337, 0.0
        %v427 = vmax.f32 %v340, 0.0
        %v428 = vmax.f32 %v343, 0.0
        %v429 = vmax.f32 %v346, 0.0
        %v430 = vmax.f32 %v349, 0.0
        %v431 = vmax.f32 %v352, 0.0
        %v432 = vmax.f32 %v355, 0.0
        %v433 = vmax.f32 %v358, 0.0
        %v434 = vmax.f32 %v361, 0.0
        %v435 = vmax.f32 %v364, 0.0
        %v436 = vmax.f32 %v367, 0.0
        %v437 = vmax.f32 %v370, 0.0
        %v438 = vmax.f32 %v373, 0.0
        %v439 = vmax.f32 %v376, 0.0
        %v440 = vmax.f32 %v379, 0.0
        %v441 = vmax.f32 %v382, 0.0
        %v442 = vmax.f32 %v385, 0.0
        %v443 = vmax.f32 %v388, 0.0
        %v444 = vmax.f32 %v391, 0.0
        %v445 = vmax.f32 %v394, 0.0
        %v446 = vmax.f32 %v397, 0.0
        %v447 = vmax.f32 %v400, 0.0
        %v448 = vmax.f32 %v403, 0.0
        %v449 = vmax.f32 %v406, 0.0
        %v450 = vmax.f32 %v409, 0.0
        %v451 = vmax.f32 %v412, 0.0
        %v452 = vmax.f32 %v415, 0.0
        %v453 = vmax.f32 %v418, 0.0
        %v454 = vmax.f32 %v421, 0.0
        %455 = vst [vmem:[%s164] sm:$0xff] %v423
        %456 = vst [vmem:[%s164 + $0x8] sm:$0xff] %v424
        %457 = vst [vmem:[%s164 + $0x10] sm:$0xff] %v425
        %458 = vst [vmem:[%s164 + $0x18] sm:$0xff] %v426
        %459 = vst [vmem:[%s164 + $0x20] sm:$0xff] %v427
        %460 = vst [vmem:[%s164 + $0x28] sm:$0xff] %v428
        %461 = vst [vmem:[%s164 + $0x30] sm:$0xff] %v429
        %462 = vst [vmem:[%s164 + $0x38] sm:$0xff] %v430
        %463 = vst [vmem:[%s164 + $0x40] sm:$0xff] %v431
        %464 = vst [vmem:[%s164 + $0x48] sm:$0xff] %v432
        %465 = vst [vmem:[%s164 + $0x50] sm:$0xff] %v433
        %466 = vst [vmem:[%s164 + $0x58] sm:$0xff] %v434
        %467 = vst [vmem:[%s164 + $0x60] sm:$0xff] %v435
        %468 = vst [vmem:[%s164 + $0x68] sm:$0xff] %v436
        %469 = vst [vmem:[%s164 + $0x70] sm:$0xff] %v437
        %470 = vst [vmem:[%s164 + $0x78] sm:$0xff] %v438
        %471 = vst [vmem:[%s164 + $0x80] sm:$0xff] %v439
        %472 = vst [vmem:[%s164 + $0x88] sm:$0xff] %v440
        %473 = vst [vmem:[%s164 + $0x90] sm:$0xff] %v441
        %474 = vst [vmem:[%s164 + $0x98] sm:$0xff] %v442
        %475 = vst [vmem:[%s164 + $0xa0] sm:$0xff] %v443
        %476 = vst [vmem:[%s164 + $0xa8] sm:$0xff] %v444
        %477 = vst [vmem:[%s164 + $0xb0] sm:$0xff] %v445
        %478 = vst [vmem:[%s164 + $0xb8] sm:$0xff] %v446
        %479 = vst [vmem:[%s164 + $0xc0] sm:$0xff] %v447
        %480 = vst [vmem:[%s164 + $0xc8] sm:$0xff] %v448
        %481 = vst [vmem:[%s164 + $0xd0] sm:$0xff] %v449
        %482 = vst [vmem:[%s164 + $0xd8] sm:$0xff] %v450
        %483 = vst [vmem:[%s164 + $0xe0] sm:$0xff] %v451
        %484 = vst [vmem:[%s164 + $0xe8] sm:$0xff] %v452
        %485 = vst [vmem:[%s164 + $0xf0] sm:$0xff] %v453
        %486 = vst [vmem:[%s164 + $0xf8] sm:$0xff] %v454
        %s487 = sand.u32 %s93, 1
        %s488 = scalar_lea.sflag [#allocation3], %s487
        %s489 = sand.u32 %s93, 1
        %s490 = smul.addr %s489, 256
        %s491 = scalar_lea.vmem [#allocation2], %s490
        // Predicated region
        $region33: #{tpu_custom_call.1} parent=31 // pred_check
          %p492 = pneg %p103
        $region34: #{tpu_custom_call.1} parent=31 // pred_check_branch
          %494 = sbr.rel (%p492) target = $region36
        $region35: #{tpu_custom_call.1} parent=31 // pred_region
          %s495 = smul.u32 32, %s17
          %497 = vsyncadd %s488, 0
          %s498 = smul.addr %s495, 8
          %s499 = scalar_lea.hbm %s3, %s498
          %s500 = sshll.u32 %s491, 4
          %s501 = int_to_ptr.vmem [resolvable:$true] %s500
          %s502 = sshll.u32 %s499, 4
          %s503 = int_to_ptr.hbm [resolvable:$true] %s502
          %508 = dma.vmem_to_hbm [thread:$0]  %s501, 4096, %s503, %s488, 128, 128, 8
        $region36: #{tpu_custom_call.1} parent=31 // pred_fallthru
          _
      $region32: #{tpu_custom_call.1} parent=5 // pred_fallthru
        _
      %p509 = scmp.le.s32.totalorder 2, %s12
      // Predicated region
      $region37: #{tpu_custom_call.1} parent=5 // pred_check
        %p510 = pneg %p509
      $region38: #{tpu_custom_call.1} parent=5 // pred_check_branch
        %512 = sbr.rel (%p510) target = $region40
      $region39: #{tpu_custom_call.1} parent=5 // pred_region
        %s513 = ssub.s32 %s12, 2
        // Predicated region
        $region41: #{tpu_custom_call.1} parent=39 // pred_check
          %p514 = pneg %p109
        $region42: #{tpu_custom_call.1} parent=39 // pred_check_branch
          %516 = sbr.rel (%p514) target = $region44
        $region43: #{tpu_custom_call.1} parent=39 // pred_region
          %s517 = sand.u32 %s94, 1
          %s518 = scalar_lea.sflag [#allocation3], %s517
          %s519 = sand.u32 %s94, 1
          %s520 = smul.addr %s519, 256
          %s521 = scalar_lea.vmem [#allocation2], %s520
          %523 = dma.done %s518, 4096
        $region44: #{tpu_custom_call.1} parent=39 // pred_fallthru
          _
      $region40: #{tpu_custom_call.1} parent=5 // pred_fallthru
        _
    $region6: #{tpu_custom_call.1} parent=1 // loop_footer
      %s16 = sadd.s32 1, %s12
    $region7: #{tpu_custom_call.1} parent=1 // loop_footer_branch
      %11 = sbr.rel target = $region3
    $region8: #{tpu_custom_call.1} parent=1 // loop_exit
      _
    %524 = vsyncpa [#allocation3], 1
    %s525 = scalar_lea.sflag [#allocation3], 1
    %526 = vsyncpa %s525, 1

</llo_original>
